<compile_context>
chip_gen: v7x
topology: tpu7x:2x2x1
jax: 0.10.0
libtpu: 0.0.40
codegen_flags: <defaults>
</compile_context>

<pallas_src>
import numpy as np
import jax
import jax.numpy as jnp
from jax.experimental import pallas as pl
from jax.experimental.pallas import tpu as pltpu


# ----------------------------------------------------------------------------
# Operator-matrix / parameter setup (host-side glue, plain numpy / JAX)
# ----------------------------------------------------------------------------
def _adaptive_pool_matrix(in_size, out_size):
    """P[i, h] = 1/bin_size if h is in adaptive-avg-pool bin i (PyTorch bins)."""
    P = np.zeros((out_size, in_size), dtype=np.float32)
    for i in range(out_size):
        start = (i * in_size) // out_size
        end = -((-(i + 1) * in_size) // out_size)  # ceil((i+1)*in/out)
        P[i, start:end] = 1.0 / float(end - start)
    return P


def _bilinear_upsample_matrix(out_size, in_size):
    """U[o, i]: bilinear weights, align_corners=False (nn.Upsample default)."""
    U = np.zeros((out_size, in_size), dtype=np.float32)
    scale = in_size / out_size
    for o in range(out_size):
        src = (o + 0.5) * scale - 0.5
        if src < 0.0:
            src = 0.0
        i0 = min(int(np.floor(src)), in_size - 1)
        i1 = min(i0 + 1, in_size - 1)
        lam = src - i0
        U[o, i0] += 1.0 - lam
        U[o, i1] += lam
    return U


def _init_level_params(key, in_channels, out_channels):
    """Deterministic synthetic weights for Conv2d(1x1, bias=False) + BatchNorm2d (eval)."""
    k_w, k_g, k_b, k_m, k_v = jax.random.split(key, 5)
    wc = 0.1 * jax.random.normal(k_w, (out_channels, in_channels), jnp.float32)
    gamma = jax.random.uniform(k_g, (out_channels,), jnp.float32, 0.5, 1.5)
    beta = 0.1 * jax.random.normal(k_b, (out_channels,), jnp.float32)
    running_mean = 0.1 * jax.random.normal(k_m, (out_channels,), jnp.float32)
    running_var = jax.random.uniform(k_v, (out_channels,), jnp.float32, 0.5, 1.5)
    eps = 1e-5
    scale = gamma / jnp.sqrt(running_var + eps)           # fold BN (eval mode)
    shift = beta - running_mean * scale
    return {
        "wc": wc,
        "scale": scale.reshape(out_channels, 1),
        "shift": shift.reshape(out_channels, 1),
    }


def _pick_tk(c_in):
    # Prefer large, 128-multiple reduction tiles: keeps the (R, TK) weight block
    # lane-aligned and the streaming x block big (>=512 rows at real sizes per
    # the mem-bound tiling measurements).  Fall back to full C_in when it is
    # small or misaligned.  On v7x (64 MiB VMEM) keep TK <= ~1024 at real sizes.
    for cand in (512, 256, 128):
        if c_in % cand == 0:
            return cand
    return c_in


def _vmem_limit_bytes():
    # Raise the scoped-VMEM cap above the 16/32 MiB defaults (v6e benefits from
    # bigger double-buffered tiles) but stay well under physical capacity
    # (v7x has only 64 MiB per TensorCore).  Safe fallback if the query fails.
    try:
        cap = pltpu.get_tpu_info().vmem_capacity_bytes
        return int(min(96 * 1024 * 1024, cap * 3 // 4))
    except Exception:
        return 32 * 1024 * 1024


# ----------------------------------------------------------------------------
# Fused Pallas kernel: grid = (batch "parallel", C_in reduction "arbitrary")
# ----------------------------------------------------------------------------
def _ppm_fused_kernel(x_ref, kpool_ref, w_ref, shift_ref, kup_ref, o_ref, acc_ref):
    k = pl.program_id(1)

    @pl.when(k == 0)
    def _init():
        acc_ref[...] = jnp.zeros_like(acc_ref)

    # AdaptiveAvgPool2d for every pyramid level at once (lane-packed sum(L*L)
    # columns).  bf16 operands, f32 accumulation; pooled stays f32 from here on.
    pooled = jnp.dot(x_ref[0], kpool_ref[...],
                     preferred_element_type=jnp.float32)            # (TK, LL)
    # 1x1 conv (BN scale pre-folded), partial sum over this C_in tile.
    acc_ref[...] += jnp.dot(w_ref[...], pooled,
                            preferred_element_type=jnp.float32)     # (R, LL)

    @pl.when(k == pl.num_programs(1) - 1)
    def _finalize():
        # BN shift + ReLU.  The per-level column mask is folded into shift_ref
        # (-1e30 in other levels' columns), so ReLU clamps those to exactly 0.
        z = jnp.maximum(acc_ref[...] + shift_ref[...], 0.0)
        # Bilinear upsample of every level + channel concat as one matmul.
        # Lane dim Ho*Wo is a multiple of 128 -> dense stores.
        o_ref[0] = jnp.dot(z, kup_ref[...],
                           preferred_element_type=jnp.float32).astype(o_ref.dtype)


def _ppm_fused_call(x3, kpool, w_all, shift_full, kup, *, tk):
    N, C_in, HW = x3.shape
    R, LL = shift_full.shape
    HWo = kup.shape[1]
    assert C_in % tk == 0, "reduction tile must divide C_in"
    K = pl.cdiv(C_in, tk)
    return pl.pallas_call(
        _ppm_fused_kernel,
        out_shape=jax.ShapeDtypeStruct((N, R, HWo), jnp.float32),
        grid=(N, K),
        in_specs=[
            # Streaming x tile: (TK, HW) per (batch, k) step — double-buffered
            # by the BlockSpec pipeline (the mem-bound operand).
            pl.BlockSpec((1, tk, HW), lambda b, k: (b, k, 0)),
            # Pooling matrix: resident across the whole grid.
            pl.BlockSpec((HW, LL), lambda b, k: (0, 0)),
            # Conv weight (BN scale folded), tiled along the C_in reduction.
            pl.BlockSpec((R, tk), lambda b, k: (0, k)),
            # BN shift with the level mask folded in.
            pl.BlockSpec((R, LL), lambda b, k: (0, 0)),
            # Row-stacked bilinear upsample matrix.
            pl.BlockSpec((LL, HWo), lambda b, k: (0, 0)),
        ],
        out_specs=pl.BlockSpec((1, R, HWo), lambda b, k: (b, 0, 0)),
        scratch_shapes=[pltpu.VMEM((R, LL), jnp.float32)],
        compiler_params=pltpu.CompilerParams(
            dimension_semantics=("parallel", "arbitrary"),
            vmem_limit_bytes=_vmem_limit_bytes(),
        ),
    )(x3, kpool, w_all, shift_full, kup)


def pyramid_pooling_module(x, level_params, out_size, levels=(1, 2, 3, 6),
                           tk=None, compute_dtype=jnp.bfloat16):
    """x: (N, C_in, H, W) float32 -> (N, len(levels)*C_out, Ho, Wo) float32."""
    N, C_in, H, W = x.shape
    Ho, Wo = out_size
    C_out = level_params[0]["wc"].shape[0]
    G = len(levels)
    L_tot = sum(lev * lev for lev in levels)
    R = G * C_out

    # Build the fused operator matrices host-side (shared across the batch).
    kpool_cols, kup_rows, w_rows = [], [], []
    shift_full = np.full((R, L_tot), -1e30, dtype=np.float32)  # mask folded in
    off = 0
    for g, (lev, p) in enumerate(zip(levels, level_params)):
        Ph = _adaptive_pool_matrix(H, lev)
        Pw = _adaptive_pool_matrix(W, lev)
        Uh = _bilinear_upsample_matrix(Ho, lev)
        Uw = _bilinear_upsample_matrix(Wo, lev)
        kpool_cols.append(np.kron(Ph, Pw).T)                           # (H*W, lev*lev)
        kup_rows.append(np.kron(Uh, Uw).T)                             # (lev*lev, Ho*Wo)
        w_rows.append(np.asarray(p["scale"]) * np.asarray(p["wc"]))    # BN scale folded
        shift_full[g * C_out:(g + 1) * C_out, off:off + lev * lev] = np.asarray(p["shift"])
        off += lev * lev

    kpool = np.concatenate(kpool_cols, axis=1)     # (H*W, L_tot)
    kup = np.concatenate(kup_rows, axis=0)         # (L_tot, Ho*Wo)
    w_all = np.concatenate(w_rows, axis=0)         # (R, C_in)  shared by all batches

    if tk is None:
        tk = _pick_tk(C_in)

    x3 = x.reshape(N, C_in, H * W).astype(compute_dtype)
    out3 = _ppm_fused_call(
        x3,
        jnp.asarray(kpool, compute_dtype),    # large streaming operands -> bf16
        jnp.asarray(w_all, jnp.float32),      # small operands stay f32 (accuracy)
        jnp.asarray(shift_full, jnp.float32),
        jnp.asarray(kup, jnp.float32),
        tk=tk,
    )
    return out3.reshape(N, R, Ho, Wo)


# ----------------------------------------------------------------------------
# Pure-JAX reference (mirrors the PyTorch module with eval-mode BatchNorm, f32)
# ----------------------------------------------------------------------------
def pyramid_pooling_reference(x, level_params, out_size, levels=(1, 2, 3, 6)):
    N, C_in, H, W = x.shape
    Ho, Wo = out_size
    feats = []
    for level, p in zip(levels, level_params):
        Ph = jnp.asarray(_adaptive_pool_matrix(H, level))
        Pw = jnp.asarray(_adaptive_pool_matrix(W, level))
        Uh = jnp.asarray(_bilinear_upsample_matrix(Ho, level))
        Uw = jnp.asarray(_bilinear_upsample_matrix(Wo, level))
        pooled = jnp.einsum("lh,nchw,mw->nclm", Ph, x, Pw)          # AdaptiveAvgPool2d
        y = jnp.einsum("oc,nclm->nolm", p["wc"], pooled)            # Conv2d 1x1
        C_out = p["wc"].shape[0]
        scale = p["scale"].reshape(1, C_out, 1, 1)
        shift = p["shift"].reshape(1, C_out, 1, 1)
        z = jax.nn.relu(y * scale + shift)                          # BN(eval)+ReLU
        up = jnp.einsum("hl,nolm,wm->nohw", Uh, z, Uw)              # bilinear upsample
        feats.append(up)
    return jnp.concatenate(feats, axis=1)


# ----------------------------------------------------------------------------
if __name__ == "__main__":
    # TODO(synk): BatchNorm2d is implemented in inference mode (fixed running
    # stats); training-mode batch statistics are not reproduced.
    N, C_in, H, W = 2, 256, 16, 16     # C_in=256 so the reduction grid has >1 step
    C_out = 4
    out_size = (16, 16)
    levels = (1, 2, 3, 6)

    key = jax.random.PRNGKey(0)
    k_x, *k_levels = jax.random.split(key, 1 + len(levels))
    x = jax.random.normal(k_x, (N, C_in, H, W), jnp.float32)
    level_params = [_init_level_params(k, C_in, C_out) for k in k_levels]

    # tk=128 (instead of the auto-picked 256) so this toy size exercises a real
    # multi-step C_in reduction with the pl.when init / finalize paths.
    out = pyramid_pooling_module(x, level_params, out_size, levels, tk=128)
    out = jax.block_until_ready(out)

    ref = jax.block_until_ready(
        pyramid_pooling_reference(x, level_params, out_size, levels)
    )

    assert out.shape == (N, len(levels) * C_out, out_size[0], out_size[1]), out.shape
    assert out.dtype == jnp.float32
    # bf16 only on the x / kpool stream; everything downstream stays f32.
    np.testing.assert_allclose(np.asarray(out), np.asarray(ref), rtol=2e-2, atol=2e-2)
    print("KERNEL_OK")
</pallas_src>

<mosaic_0001>
module attributes {stable_mosaic.version = 11 : i64} {
  func.func @_ppm_fused_kernel(%arg0: i32, %arg1: i32, %arg2: memref<1x128x256xbf16, #tpu.memory_space<vmem>>, %arg3: memref<256x50xbf16, #tpu.memory_space<vmem>>, %arg4: memref<16x128xf32, #tpu.memory_space<vmem>>, %arg5: memref<16x50xf32, #tpu.memory_space<vmem>>, %arg6: memref<50x256xf32, #tpu.memory_space<vmem>>, %arg7: memref<1x16x256xf32, #tpu.memory_space<vmem>>, %arg8: memref<16x50xf32, #tpu.memory_space<vmem>>) attributes {dimension_semantics = [#tpu.dimension_semantics<parallel>, #tpu.dimension_semantics<arbitrary>], iteration_bounds = array<i64: 2, 2>, scalar_prefetch = 0 : i64, scratch_operands = 1 : i64, tpu.core_type = #tpu.core_type<tc>, window_params = [{transform_indices = @transform_0, window_bounds = array<i64: 1, 128, 256>}, {pipeline_mode = #tpu.pipeline_mode<synchronous>, transform_indices = @transform_1, window_bounds = array<i64: 256, 50>}, {transform_indices = @transform_2, window_bounds = array<i64: 16, 128>}, {pipeline_mode = #tpu.pipeline_mode<synchronous>, transform_indices = @transform_3, window_bounds = array<i64: 16, 50>}, {pipeline_mode = #tpu.pipeline_mode<synchronous>, transform_indices = @transform_4, window_bounds = array<i64: 50, 256>}, {transform_indices = @transform_5, window_bounds = array<i64: 1, 16, 256>}]} {
    %c0_i32 = arith.constant 0 : i32
    %0 = arith.cmpi eq, %arg1, %c0_i32 : i32
    %1 = arith.extui %0 : i1 to i32
    %c0_i32_0 = arith.constant 0 : i32
    %2 = arith.cmpi ne, %1, %c0_i32_0 : i32
    scf.if %2 {
      %cst_13 = arith.constant 0.000000e+00 : f32
      %15 = vector.broadcast %cst_13 : f32 to vector<16x50xf32>
      %c0_14 = arith.constant 0 : index
      %c0_15 = arith.constant 0 : index
      %16 = vector.load %arg8[%c0_14, %c0_15] : memref<16x50xf32, #tpu.memory_space<vmem>>, vector<16x50xf32>
      tpu.vector_store %arg8[%c0_14, %c0_15], %15 {strides = array<i32>} : memref<16x50xf32, #tpu.memory_space<vmem>>, vector<16x50xf32>,
    } else {
    }
    %c0 = arith.constant 0 : index
    %c0_1 = arith.constant 0 : index
    %c0_2 = arith.constant 0 : index
    %3 = vector.load %arg2[%c0, %c0_1, %c0_2] : memref<1x128x256xbf16, #tpu.memory_space<vmem>>, vector<1x128x256xbf16>
    %4 = vector.shape_cast %3 : vector<1x128x256xbf16> to vector<128x256xbf16>
    %c0_3 = arith.constant 0 : index
    %c0_4 = arith.constant 0 : index
    %5 = vector.load %arg3[%c0_3, %c0_4] : memref<256x50xbf16, #tpu.memory_space<vmem>>, vector<256x50xbf16>
    %cst = arith.constant dense<0.000000e+00> : vector<128x50xf32>
    %6 = tpu.matmul %4, %5, %cst {dimension_numbers = #tpu.dot_dimension_numbers<[1], [0], [0], [1], [0, 0, 1, 1], [], []>} : vector<128x256xbf16>, vector<256x50xbf16>, vector<128x50xf32> -> vector<128x50xf32>
    %c0_5 = arith.constant 0 : index
    %c0_6 = arith.constant 0 : index
    %7 = vector.load %arg8[%c0_5, %c0_6] : memref<16x50xf32, #tpu.memory_space<vmem>>, vector<16x50xf32>
    %c0_7 = arith.constant 0 : index
    %c0_8 = arith.constant 0 : index
    %8 = vector.load %arg4[%c0_7, %c0_8] : memref<16x128xf32, #tpu.memory_space<vmem>>, vector<16x128xf32>
    %cst_9 = arith.constant dense<0.000000e+00> : vector<16x50xf32>
    %9 = tpu.matmul %8, %6, %cst_9 {dimension_numbers = #tpu.dot_dimension_numbers<[1], [0], [0], [1], [0, 0, 1, 1], [], []>} : vector<16x128xf32>, vector<128x50xf32>, vector<16x50xf32> -> vector<16x50xf32>
    %10 = arith.addf %7, %9 : vector<16x50xf32>
    %c0_10 = arith.constant 0 : index
    %c0_11 = arith.constant 0 : index
    %11 = vector.load %arg8[%c0_10, %c0_11] : memref<16x50xf32, #tpu.memory_space<vmem>>, vector<16x50xf32>
    tpu.vector_store %arg8[%c0_10, %c0_11], %10 {strides = array<i32>} : memref<16x50xf32, #tpu.memory_space<vmem>>, vector<16x50xf32>,
    %c1_i32 = arith.constant 1 : i32
    %12 = arith.cmpi eq, %arg1, %c1_i32 : i32
    %13 = arith.extui %12 : i1 to i32
    %c0_i32_12 = arith.constant 0 : i32
    %14 = arith.cmpi ne, %13, %c0_i32_12 : i32
    scf.if %14 {
      %c0_13 = arith.constant 0 : index
      %c0_14 = arith.constant 0 : index
      %15 = vector.load %arg8[%c0_13, %c0_14] : memref<16x50xf32, #tpu.memory_space<vmem>>, vector<16x50xf32>
      %c0_15 = arith.constant 0 : index
      %c0_16 = arith.constant 0 : index
      %16 = vector.load %arg5[%c0_15, %c0_16] : memref<16x50xf32, #tpu.memory_space<vmem>>, vector<16x50xf32>
      %17 = arith.addf %15, %16 : vector<16x50xf32>
      %cst_17 = arith.constant 0.000000e+00 : f32
      %18 = vector.broadcast %cst_17 : f32 to vector<16x50xf32>
      %19 = arith.maximumf %17, %18 : vector<16x50xf32>
      %c0_18 = arith.constant 0 : index
      %c0_19 = arith.constant 0 : index
      %20 = vector.load %arg6[%c0_18, %c0_19] : memref<50x256xf32, #tpu.memory_space<vmem>>, vector<50x256xf32>
      %cst_20 = arith.constant dense<0.000000e+00> : vector<16x256xf32>
      %21 = tpu.matmul %19, %20, %cst_20 {dimension_numbers = #tpu.dot_dimension_numbers<[1], [0], [0], [1], [0, 0, 1, 1], [], []>} : vector<16x50xf32>, vector<50x256xf32>, vector<16x256xf32> -> vector<16x256xf32>
      %c0_21 = arith.constant 0 : index
      %c0_22 = arith.constant 0 : index
      %c0_23 = arith.constant 0 : index
      %22 = vector.load %arg7[%c0_21, %c0_22, %c0_23] : memref<1x16x256xf32, #tpu.memory_space<vmem>>, vector<1x16x256xf32>
      %23 = vector.shape_cast %22 : vector<1x16x256xf32> to vector<16x256xf32>
      %24 = vector.shape_cast %21 : vector<16x256xf32> to vector<1x16x256xf32>
      tpu.vector_store %arg7[%c0_21, %c0_22, %c0_23], %24 {strides = array<i32>} : memref<1x16x256xf32, #tpu.memory_space<vmem>>, vector<1x16x256xf32>,
    } else {
    }
    return
  }
  func.func @transform_0(%arg0: i32, %arg1: i32) -> (i32, i32, i32) {
    %c0_i32 = arith.constant 0 : i32
    %c0_i32_0 = arith.constant 0 : i32
    return %arg0, %arg1, %c0_i32 : i32, i32, i32
  }
  func.func @transform_1(%arg0: i32, %arg1: i32) -> (i32, i32) {
    %c0_i32 = arith.constant 0 : i32
    %c0_i32_0 = arith.constant 0 : i32
    %c0_i32_1 = arith.constant 0 : i32
    return %c0_i32, %c0_i32_0 : i32, i32
  }
  func.func @transform_2(%arg0: i32, %arg1: i32) -> (i32, i32) {
    %c0_i32 = arith.constant 0 : i32
    %c0_i32_0 = arith.constant 0 : i32
    return %c0_i32, %arg1 : i32, i32
  }
  func.func @transform_3(%arg0: i32, %arg1: i32) -> (i32, i32) {
    %c0_i32 = arith.constant 0 : i32
    %c0_i32_0 = arith.constant 0 : i32
    %c0_i32_1 = arith.constant 0 : i32
    return %c0_i32, %c0_i32_0 : i32, i32
  }
  func.func @transform_4(%arg0: i32, %arg1: i32) -> (i32, i32) {
    %c0_i32 = arith.constant 0 : i32
    %c0_i32_0 = arith.constant 0 : i32
    %c0_i32_1 = arith.constant 0 : i32
    return %c0_i32, %c0_i32_0 : i32, i32
  }
  func.func @transform_5(%arg0: i32, %arg1: i32) -> (i32, i32, i32) {
    %c0_i32 = arith.constant 0 : i32
    %c0_i32_0 = arith.constant 0 : i32
    %c0_i32_1 = arith.constant 0 : i32
    return %arg0, %c0_i32, %c0_i32_0 : i32, i32, i32
  }
}

</mosaic_0001>

<llo_original>
// kernel: tpu_custom_call.1
$region0: #{tpu_custom_call.1}
  #allocation0 [shape = 'u32[]', space=smem, size = 0x4, offset = 0x4, fixed_abs, tag = 'smem constant byte address 0x4 - core index']
  #allocation1 [shape = 'u32[144,128]{1,0:T(1,128)}', space=vmem, size = 0x12000, scoped, tag = 'internal scratch']
  #allocation2 [shape = 'f32[16,50]{1,0:T(8,128)}', space=vmem, size = 0x2000, scoped, tag = 'scratch operand']
  %s0 = inlined_call_operand.hbm [shape: bf16[2,256,256], index: 0, kind: input, shape index: {}]
  %s1 = inlined_call_operand.vmem [shape: bf16[256,50], index: 1, kind: input, shape index: {}]
  %s2 = inlined_call_operand.vmem [shape: f32[16,256], index: 2, kind: input, shape index: {}]
  %s3 = inlined_call_operand.vmem [shape: f32[16,50], index: 3, kind: input, shape index: {}]
  %s4 = inlined_call_operand.vmem [shape: f32[50,256], index: 4, kind: input, shape index: {}]
  %s5 = inlined_call_operand.hbm [shape: f32[2,16,256], index: 5, kind: output, shape index: {}]
  %s6 = sld [smem:[#allocation0]]
  $region103: #{tpu_custom_call.1} parent=0
    _
  %s8 = ssub.s32 1, %s6
  %s9 = scalar_select 0, %s8, %s6
  $region1: #{tpu_custom_call.1} parent=0
    #allocation3 [shape = 'u8[131072]{0}', space=vmem, size = 0x20000, scoped, tag = 'input window, operand 0']
    #allocation4 [shape = 's32[2]{0}', space=sflag, size = 0x8, scoped, tag = 'scoped memory for tpu_custom_call.1']
    #allocation5 [shape = 's32[2]{0}', space=sflag, size = 0x8, scoped, tag = 'scoped memory for tpu_custom_call.1']
    #allocation6 [shape = 'u8[16384]{0}', space=vmem, size = 0x4000, scoped, tag = 'input window, operand 2']
    #allocation7 [shape = 'u8[32768]{0}', space=vmem, size = 0x8000, scoped, tag = 'output window, operand 0']
    %10 = vsyncpa [#allocation4], 0
    %s11 = scalar_lea.sflag [#allocation4], 1
    %12 = vsyncpa %s11, 0
    %13 = vsyncpa [#allocation5], 0
    %s14 = scalar_lea.sflag [#allocation5], 1
    %15 = vsyncpa %s14, 0
    loop: start=0, step=1, limit=6
    $region2: #{tpu_custom_call.1} parent=1 // loop_pre_header
      _
    $region3: #{tpu_custom_call.1} parent=1 // loop_header
      %s17 = sphi 0, %s21
      %p18 = scmp.ge.s32.totalorder %s17, 6
      %s24 = sphi 0, %s36
      %s25 = sphi 0, %s32
      %s26 = sphi 0, %s24
      %s27 = sphi 0, %s25
      %s28 = sphi 0, %s26
      %s29 = sphi 0, %s27
      %s41 = sphi 0, %s43
      %s44 = sphi 0, %s41
      %s45 = sphi 0, %s44
      %s61 = sphi 0, %s45
      %s65 = sphi 0, %s65
      %s67 = sphi 0, %s65
      %s68 = sphi 0, %s67
      %s82 = sphi 0, %s68
      %s88 = sphi 0, %s90
      %s91 = sphi 0, %s88
      %s92 = sphi 0, %s91
      %s108 = sphi 0, %s92
      %s112 = sphi 0, %s112
      %s114 = sphi 0, %s112
      %s115 = sphi 0, %s114
      %s129 = sphi 0, %s115
      %s133 = sphi 0, %s133
      %s135 = sphi 0, %s133
      %s136 = sphi 0, %s135
      %s150 = sphi 0, %s136
      %s156 = sphi 0, %s158
      %s159 = sphi 0, %s156
      %s160 = sphi 0, %s159
      %s176 = sphi 0, %s160
    $region4: #{tpu_custom_call.1} parent=1 // loop_header_branch
      %20 = sbr.rel (%p18) target = $region8
    $region5: #{tpu_custom_call.1} parent=1 // loop_body
      %s22 = ssub.s32 %s17, 1
      %s23 = ssub.s32 %s17, 2
      %s30 = sadd.s32 1, %s25
      %p31 = scmp.ge.s32.totalorder %s30, 2
      %s32 = scalar_select %p31, 0, %s30
      %s33 = sadd.s32 1, %s24
      %s34 = scalar_select %p31, %s33, %s24
      %p35 = scmp.ge.s32.totalorder %s34, 2
      %s36 = scalar_select %p35, 0, %s34
      %s37 = ssub.s32 %s24, %s36
      %s38 = ssub.s32 %s25, %s32
      %s39 = sor.u32 %s37, %s38
      %p40 = scmp.eq.s32.totalorder %s39, 0
      %s42 = sadd.s32 %s41, 1
      %s43 = scalar_select %p40, %s41, %s42
      %p46 = pneg %p40
      %p47 = scmp.eq.s32.totalorder %s17, 3
      %p48 = por %p46, %p47
      %p49 = scmp.ne.s32.totalorder %s41, %s44
      %p50 = scmp.eq.s32.totalorder %s17, 0
      %p51 = por %p49, %p50
      %p52 = scmp.ne.s32.totalorder %s41, %s44
      %p53 = scmp.eq.s32.totalorder %s22, 3
      %p54 = por %p52, %p53
      %p55 = scmp.ne.s32.totalorder %s44, %s45
      %p56 = scmp.eq.s32.totalorder %s22, 0
      %p57 = por %p55, %p56
      %p58 = scmp.ne.s32.totalorder %s44, %s45
      %p59 = scmp.eq.s32.totalorder %s23, 3
      %p60 = por %p58, %p59
      %p62 = scmp.ne.s32.totalorder %s45, %s61
      %p63 = scmp.eq.s32.totalorder %s23, 0
      %p64 = por %p62, %p63
      %s66 = sadd.s32 %s65, 1
      %p69 = scmp.eq.s32.totalorder %s17, 3
      %p70 = scmp.ne.s32.totalorder %s65, %s67
      %p71 = scmp.eq.s32.totalorder %s17, 0
      %p72 = por %p70, %p71
      %p73 = scmp.ne.s32.totalorder %s65, %s67
      %p74 = scmp.eq.s32.totalorder %s22, 3
      %p75 = por %p73, %p74
      %p76 = scmp.ne.s32.totalorder %s67, %s68
      %p77 = scmp.eq.s32.totalorder %s22, 0
      %p78 = por %p76, %p77
      %p79 = scmp.ne.s32.totalorder %s67, %s68
      %p80 = scmp.eq.s32.totalorder %s23, 3
      %p81 = por %p79, %p80
      %p83 = scmp.ne.s32.totalorder %s68, %s82
      %p84 = scmp.eq.s32.totalorder %s23, 0
      %p85 = por %p83, %p84
      %s86 = ssub.s32 %s25, %s32
      %p87 = scmp.eq.s32.totalorder %s86, 0
      %s89 = sadd.s32 %s88, 1
      %s90 = scalar_select %p87, %s88, %s89
      %p93 = pneg %p87
      %p94 = scmp.eq.s32.totalorder %s17, 3
      %p95 = por %p93, %p94
      %p96 = scmp.ne.s32.totalorder %s88, %s91
      %p97 = scmp.eq.s32.totalorder %s17, 0
      %p98 = por %p96, %p97
      %p99 = scmp.ne.s32.totalorder %s88, %s91
      %p100 = scmp.eq.s32.totalorder %s22, 3
      %p101 = por %p99, %p100
      %p102 = scmp.ne.s32.totalorder %s91, %s92
      %p103 = scmp.eq.s32.totalorder %s22, 0
      %p104 = por %p102, %p103
      %p105 = scmp.ne.s32.totalorder %s91, %s92
      %p106 = scmp.eq.s32.totalorder %s23, 3
      %p107 = por %p105, %p106
      %p109 = scmp.ne.s32.totalorder %s92, %s108
      %p110 = scmp.eq.s32.totalorder %s23, 0
      %p111 = por %p109, %p110
      %s113 = sadd.s32 %s112, 1
      %p116 = scmp.eq.s32.totalorder %s17, 3
      %p117 = scmp.ne.s32.totalorder %s112, %s114
      %p118 = scmp.eq.s32.totalorder %s17, 0
      %p119 = por %p117, %p118
      %p120 = scmp.ne.s32.totalorder %s112, %s114
      %p121 = scmp.eq.s32.totalorder %s22, 3
      %p122 = por %p120, %p121
      %p123 = scmp.ne.s32.totalorder %s114, %s115
      %p124 = scmp.eq.s32.totalorder %s22, 0
      %p125 = por %p123, %p124
      %p126 = scmp.ne.s32.totalorder %s114, %s115
      %p127 = scmp.eq.s32.totalorder %s23, 3
      %p128 = por %p126, %p127
      %p130 = scmp.ne.s32.totalorder %s115, %s129
      %p131 = scmp.eq.s32.totalorder %s23, 0
      %p132 = por %p130, %p131
      %s134 = sadd.s32 %s133, 1
      %p137 = scmp.eq.s32.totalorder %s17, 3
      %p138 = scmp.ne.s32.totalorder %s133, %s135
      %p139 = scmp.eq.s32.totalorder %s17, 0
      %p140 = por %p138, %p139
      %p141 = scmp.ne.s32.totalorder %s133, %s135
      %p142 = scmp.eq.s32.totalorder %s22, 3
      %p143 = por %p141, %p142
      %p144 = scmp.ne.s32.totalorder %s135, %s136
      %p145 = scmp.eq.s32.totalorder %s22, 0
      %p146 = por %p144, %p145
      %p147 = scmp.ne.s32.totalorder %s135, %s136
      %p148 = scmp.eq.s32.totalorder %s23, 3
      %p149 = por %p147, %p148
      %p151 = scmp.ne.s32.totalorder %s136, %s150
      %p152 = scmp.eq.s32.totalorder %s23, 0
      %p153 = por %p151, %p152
      %s154 = ssub.s32 %s24, %s36
      %p155 = scmp.eq.s32.totalorder %s154, 0
      %s157 = sadd.s32 %s156, 1
      %s158 = scalar_select %p155, %s156, %s157
      %p161 = pneg %p155
      %p162 = scmp.eq.s32.totalorder %s17, 3
      %p163 = por %p161, %p162
      %p164 = scmp.ne.s32.totalorder %s156, %s159
      %p165 = scmp.eq.s32.totalorder %s17, 0
      %p166 = por %p164, %p165
      %p167 = scmp.ne.s32.totalorder %s156, %s159
      %p168 = scmp.eq.s32.totalorder %s22, 3
      %p169 = por %p167, %p168
      %p170 = scmp.ne.s32.totalorder %s159, %s160
      %p171 = scmp.eq.s32.totalorder %s22, 0
      %p172 = por %p170, %p171
      %p173 = scmp.ne.s32.totalorder %s159, %s160
      %p174 = scmp.eq.s32.totalorder %s23, 3
      %p175 = por %p173, %p174
      %p177 = scmp.ne.s32.totalorder %s160, %s176
      %p178 = scmp.eq.s32.totalorder %s23, 0
      %p179 = por %p177, %p178
      %p180 = scmp.le.s32.totalorder 1, %s17
      %p181 = scmp.lt.s32.totalorder %s17, 5
      %p182 = pnand %p180, %p181
      %p183 = pneg %p182
      // Predicated region
      $region9: #{tpu_custom_call.1} parent=5 // pred_check
        _
      $region10: #{tpu_custom_call.1} parent=5 // pred_check_branch
        %185 = sbr.rel (%p182) target = $region12
      $region11: #{tpu_custom_call.1} parent=5 // pred_region
        %s186 = ssub.s32 %s17, 1
        // Predicated region
        $region13: #{tpu_custom_call.1} parent=11 // pred_check
          %p187 = pneg %p78
        $region14: #{tpu_custom_call.1} parent=11 // pred_check_branch
          %189 = sbr.rel (%p187) target = $region16
        $region15: #{tpu_custom_call.1} parent=11 // pred_region
          _
        $region16: #{tpu_custom_call.1} parent=11 // pred_fallthru
          _
        // Predicated region
        $region17: #{tpu_custom_call.1} parent=11 // pred_check
          %p190 = pneg %p125
        $region18: #{tpu_custom_call.1} parent=11 // pred_check_branch
          %192 = sbr.rel (%p190) target = $region20
        $region19: #{tpu_custom_call.1} parent=11 // pred_region
          _
        $region20: #{tpu_custom_call.1} parent=11 // pred_fallthru
          _
        // Predicated region
        $region21: #{tpu_custom_call.1} parent=11 // pred_check
          %p193 = pneg %p146
        $region22: #{tpu_custom_call.1} parent=11 // pred_check_branch
          %195 = sbr.rel (%p193) target = $region24
        $region23: #{tpu_custom_call.1} parent=11 // pred_region
          _
        $region24: #{tpu_custom_call.1} parent=11 // pred_fallthru
          _
      $region12: #{tpu_custom_call.1} parent=5 // pred_fallthru
        _
      %p196 = scmp.lt.s32.totalorder %s17, 4
      // Predicated region
      $region25: #{tpu_custom_call.1} parent=5 // pred_check
        %p197 = pneg %p196
      $region26: #{tpu_custom_call.1} parent=5 // pred_check_branch
        %199 = sbr.rel (%p197) target = $region28
      $region27: #{tpu_custom_call.1} parent=5 // pred_region
        // Predicated region
        $region29: #{tpu_custom_call.1} parent=27 // pred_check
          %p200 = pneg %p51
        $region30: #{tpu_custom_call.1} parent=27 // pred_check_branch
          %202 = sbr.rel (%p200) target = $region32
        $region31: #{tpu_custom_call.1} parent=27 // pred_region
          %s203 = sand.u32 %s41, 1
          %s204 = scalar_lea.sflag [#allocation4], %s203
          %s205 = sand.u32 %s41, 1
          %s206 = smul.addr %s205, 128
          %s207 = scalar_lea.vmem [#allocation3], %s206
          %s208 = smul.u32 16, %s25
          %s210 = ssub.s32 2048, 2048
          %211 = vsyncadd %s204, %s210
          %s212 = smul.addr %s208, 2
          %s213 = smul.addr %s24, 64
          %s214 = sadd.s32 %s212, %s213
          %s215 = smul.addr %s214, 64
          %s216 = scalar_lea.hbm %s0, %s215
          %s217 = sshll.u32 %s207, 4
          %s218 = int_to_ptr.vmem [resolvable:$true] %s217
          %223 = dma.hbm_to_vmem [thread:$0]  %s216, 2048, %s218, %s204, 128, 128, 8
        $region32: #{tpu_custom_call.1} parent=27 // pred_fallthru
          _
        // Predicated region
        $region33: #{tpu_custom_call.1} parent=27 // pred_check
          %p224 = pneg %p98
        $region34: #{tpu_custom_call.1} parent=27 // pred_check_branch
          %226 = sbr.rel (%p224) target = $region36
        $region35: #{tpu_custom_call.1} parent=27 // pred_region
          %s227 = sand.u32 %s88, 1
          %s228 = sand.u32 %s88, 1
          %s229 = smul.addr %s228, 16
          %s230 = scalar_lea.vmem [#allocation6], %s229
          %s231 = smul.addr %s25, 8
          %s232 = scalar_lea.vmem %s2, %s231
          // Predicated region
          $region37: #{tpu_custom_call.1} parent=35 // pred_check
            _
          $region38: #{tpu_custom_call.1} parent=35 // pred_check_branch
            %234 = sbr.rel (0) target = $region40
          $region39: #{tpu_custom_call.1} parent=35 // pred_region
            // Predicated region
            $region41: #{tpu_custom_call.1} parent=39 // pred_check
              _
            $region42: #{tpu_custom_call.1} parent=39 // pred_check_branch
              %236 = sbr.rel (0) target = $region44
            $region43: #{tpu_custom_call.1} parent=39 // pred_region
              // Predicated region
              $region56: #{tpu_custom_call.1} parent=43 // pred_check
                _
              $region57: #{tpu_custom_call.1} parent=43 // pred_check_branch
                %253 = sbr.rel (0) target = $region59
              $region58: #{tpu_custom_call.1} parent=43 // pred_region
                loop: start=0, step=1, limit=1
                $region60: #{tpu_custom_call.1} parent=58 // loop_pre_header
                  _
                $region61: #{tpu_custom_call.1} parent=58 // loop_header
                  %s255 = sphi 0, %s259
                  %p256 = scmp.ge.s32.totalorder %s255, 1
                  %s260 = sphi %s232, %s232
                  %s261 = sphi %s230, %s230
                $region62: #{tpu_custom_call.1} parent=58 // loop_header_branch
                  %258 = sbr.rel (%p256) target = $region66
                $region63: #{tpu_custom_call.1} parent=58 // loop_body
                  %v262 = vld [vmem:[%s260] sm:$0xff]
                  %263 = vst [vmem:[%s261] sm:$0xff] %v262
                  %v264 = vld [vmem:[%s260 + $0x10] sm:$0xff]
                  %265 = vst [vmem:[%s261 + $0x8] sm:$0xff] %v264
                $region64: #{tpu_custom_call.1} parent=58 // loop_footer
                  %s259 = sadd.s32 1, %s255
                $region65: #{tpu_custom_call.1} parent=58 // loop_footer_branch
                  %254 = sbr.rel target = $region61
                $region66: #{tpu_custom_call.1} parent=58 // loop_exit
                  _
              $region59: #{tpu_custom_call.1} parent=43 // pred_fallthru
                _
              // Predicated region
              $region67: #{tpu_custom_call.1} parent=43 // pred_check
                _
              $region68: #{tpu_custom_call.1} parent=43 // pred_check_branch
                %267 = sbr.rel target = $region70
              $region69: #{tpu_custom_call.1} parent=43 // pred_region
                _
              $region70: #{tpu_custom_call.1} parent=43 // pred_fallthru
                _
            $region44: #{tpu_custom_call.1} parent=39 // pred_fallthru
              _
            // Predicated region
            $region45: #{tpu_custom_call.1} parent=39 // pred_check
              _
            $region46: #{tpu_custom_call.1} parent=39 // pred_check_branch
              %238 = sbr.rel target = $region48
            $region47: #{tpu_custom_call.1} parent=39 // pred_region
              loop: start=0, step=1, limit=1
              $region49: #{tpu_custom_call.1} parent=47 // loop_pre_header
                _
              $region50: #{tpu_custom_call.1} parent=47 // loop_header
                %s241 = sphi 0, %s245
                %p242 = scmp.ge.s32.totalorder %s241, 1
                %s246 = sphi %s232, %s232
                %s247 = sphi %s230, %s230
              $region51: #{tpu_custom_call.1} parent=47 // loop_header_branch
                %244 = sbr.rel (%p242) target = $region55
              $region52: #{tpu_custom_call.1} parent=47 // loop_body
                %v248 = vld [vmem:[%s246] sm:$0xff]
                %249 = vst [vmem:[%s247] sm:$0xff] %v248
                %v250 = vld [vmem:[%s246 + $0x10] sm:$0xff]
                %251 = vst [vmem:[%s247 + $0x8] sm:$0xff] %v250
              $region53: #{tpu_custom_call.1} parent=47 // loop_footer
                %s245 = sadd.s32 1, %s241
              $region54: #{tpu_custom_call.1} parent=47 // loop_footer_branch
                %240 = sbr.rel target = $region50
              $region55: #{tpu_custom_call.1} parent=47 // loop_exit
                _
            $region48: #{tpu_custom_call.1} parent=39 // pred_fallthru
              _
          $region40: #{tpu_custom_call.1} parent=35 // pred_fallthru
            _
          %268 = vnop
        $region36: #{tpu_custom_call.1} parent=27 // pred_fallthru
          _
      $region28: #{tpu_custom_call.1} parent=5 // pred_fallthru
        _
      %p269 = scmp.le.s32.totalorder 1, %s17
      %p270 = scmp.lt.s32.totalorder %s17, 5
      %p271 = pnand %p269, %p270
      %p272 = pneg %p271
      // Predicated region
      $region71: #{tpu_custom_call.1} parent=5 // pred_check
        _
      $region72: #{tpu_custom_call.1} parent=5 // pred_check_branch
        %274 = sbr.rel (%p271) target = $region74
      $region73: #{tpu_custom_call.1} parent=5 // pred_region
        %s275 = ssub.s32 %s17, 1
        %s276 = sand.u32 %s44, 1
        %s277 = scalar_lea.sflag [#allocation4], %s276
        %s278 = sand.u32 %s44, 1
        %s279 = smul.addr %s278, 128
        %s280 = scalar_lea.vmem [#allocation3], %s279
        // Predicated region
        $region75: #{tpu_custom_call.1} parent=73 // pred_check
          %p281 = pneg %p57
        $region76: #{tpu_custom_call.1} parent=73 // pred_check_branch
          %283 = sbr.rel (%p281) target = $region78
        $region77: #{tpu_custom_call.1} parent=73 // pred_region
          %284 = dma.done %s277, 2048
        $region78: #{tpu_custom_call.1} parent=73 // pred_fallthru
          _
        %s285 = sand.u32 %s91, 1
        %s286 = sand.u32 %s91, 1
        %s287 = smul.addr %s286, 16
        %s288 = scalar_lea.vmem [#allocation6], %s287
        // Predicated region
        $region79: #{tpu_custom_call.1} parent=73 // pred_check
          %p289 = pneg %p104
        $region80: #{tpu_custom_call.1} parent=73 // pred_check_branch
          %291 = sbr.rel (%p289) target = $region82
        $region81: #{tpu_custom_call.1} parent=73 // pred_region
          _
        $region82: #{tpu_custom_call.1} parent=73 // pred_fallthru
          _
        %s292 = sand.u32 %s44, 1
        %s293 = scalar_lea.sflag [#allocation4], %s292
        %s294 = sand.u32 %s44, 1
        %s295 = smul.addr %s294, 128
        %s296 = scalar_lea.vmem [#allocation3], %s295
        %p297 = pneg %p57
        %p298 = pneg %p54
        %p299 = pneg %p78
        %p300 = pneg %p75
        %s301 = sand.u32 %s91, 1
        %s302 = sand.u32 %s91, 1
        %s303 = smul.addr %s302, 16
        %s304 = scalar_lea.vmem [#allocation6], %s303
        %p305 = pneg %p104
        %p306 = pneg %p101
        %p307 = pneg %p125
        %p308 = pneg %p122
        %p309 = pneg %p146
        %p310 = pneg %p143
        %p311 = pneg %p172
        %p312 = pneg %p169
        %s313 = sand.u32 %s159, 1
        %s314 = scalar_lea.sflag [#allocation5], %s313
        %s315 = sand.u32 %s159, 1
        %s316 = smul.addr %s315, 32
        %s317 = scalar_lea.vmem [#allocation7], %s316
        %s318 = smul.u32 16, %s27
        %p320 = scmp.eq.s32.totalorder %s27, 0
        // Predicated region
        $region83: #{tpu_custom_call.1} parent=73 // pred_check
          %p321 = pneg %p320
        $region84: #{tpu_custom_call.1} parent=73 // pred_check_branch
          %323 = sbr.rel (%p321) target = $region86
        $region85: #{tpu_custom_call.1} parent=73 // pred_region
          %vm324 = vcmask 408576
          %325 = vst.msk [vmem:[#allocation2] sm:$0xff] %vm324, 0.0
          %326 = vst.msk [vmem:[#allocation2 + $0x8] sm:$0xff] %vm324, 0.0
        $region86: #{tpu_custom_call.1} parent=73 // pred_fallthru
          _
        %v327 = vld [vmem:[%s280] sm:$0xff]
        %v328 = vld [vmem:[%s280 + $0x8] sm:$0xff]
        %v329 = vld [vmem:[%s280 + $0x10] sm:$0xff]
        %v330 = vld [vmem:[%s280 + $0x18] sm:$0xff]
        %v331 = vld [vmem:[%s280 + $0x20] sm:$0xff]
        %v332 = vld [vmem:[%s280 + $0x28] sm:$0xff]
        %v333 = vld [vmem:[%s280 + $0x30] sm:$0xff]
        %v334 = vld [vmem:[%s280 + $0x38] sm:$0xff]
        %v335 = vld [vmem:[%s280 + $0x40] sm:$0xff]
        %v336 = vld [vmem:[%s280 + $0x48] sm:$0xff]
        %v337 = vld [vmem:[%s280 + $0x50] sm:$0xff]
        %v338 = vld [vmem:[%s280 + $0x58] sm:$0xff]
        %v339 = vld [vmem:[%s280 + $0x60] sm:$0xff]
        %v340 = vld [vmem:[%s280 + $0x68] sm:$0xff]
        %v341 = vld [vmem:[%s280 + $0x70] sm:$0xff]
        %v342 = vld [vmem:[%s280 + $0x78] sm:$0xff]
        %v343 = vld [vmem:[%s1] sm:$0xf]
        %v344 = vld [vmem:[%s1 + $0x4] sm:$0xf]
        %v345 = vld [vmem:[%s1 + $0x8] sm:$0xf]
        %v346 = vld [vmem:[%s1 + $0xc] sm:$0xf]
        %v347 = vld [vmem:[%s1 + $0x10] sm:$0xf]
        %v348 = vld [vmem:[%s1 + $0x14] sm:$0xf]
        %v349 = vld [vmem:[%s1 + $0x18] sm:$0xf]
        %v350 = vld [vmem:[%s1 + $0x1c] sm:$0xf]
        %v351 = vld [vmem:[%s1 + $0x20] sm:$0xf]
        %v352 = vld [vmem:[%s1 + $0x24] sm:$0xf]
        %v353 = vld [vmem:[%s1 + $0x28] sm:$0xf]
        %v354 = vld [vmem:[%s1 + $0x2c] sm:$0xf]
        %v355 = vld [vmem:[%s1 + $0x30] sm:$0xf]
        %v356 = vld [vmem:[%s1 + $0x34] sm:$0xf]
        %v357 = vld [vmem:[%s1 + $0x38] sm:$0xf]
        %v358 = vld [vmem:[%s1 + $0x3c] sm:$0xf]
        %v359 = vld [vmem:[%s1 + $0x40] sm:$0xf]
        %v360 = vld [vmem:[%s1 + $0x44] sm:$0xf]
        %v361 = vld [vmem:[%s1 + $0x48] sm:$0xf]
        %v362 = vld [vmem:[%s1 + $0x4c] sm:$0xf]
        %v363 = vld [vmem:[%s1 + $0x50] sm:$0xf]
        %v364 = vld [vmem:[%s1 + $0x54] sm:$0xf]
        %v365 = vld [vmem:[%s1 + $0x58] sm:$0xf]
        %v366 = vld [vmem:[%s1 + $0x5c] sm:$0xf]
        %v367 = vld [vmem:[%s1 + $0x60] sm:$0xf]
        %v368 = vld [vmem:[%s1 + $0x64] sm:$0xf]
        %v369 = vld [vmem:[%s1 + $0x68] sm:$0xf]
        %v370 = vld [vmem:[%s1 + $0x6c] sm:$0xf]
        %v371 = vld [vmem:[%s1 + $0x70] sm:$0xf]
        %v372 = vld [vmem:[%s1 + $0x74] sm:$0xf]
        %v373 = vld [vmem:[%s1 + $0x78] sm:$0xf]
        %v374 = vld [vmem:[%s1 + $0x7c] sm:$0xf]
        %v391 = vunpack.c.l.b16 %v327
        %v392 = vunpack.c.h.b16 %v327
        %v393 = vunpack.c.l.b16 %v328
        %v394 = vunpack.c.h.b16 %v328
        %v395 = vunpack.c.l.b16 %v329
        %v396 = vunpack.c.h.b16 %v329
        %v397 = vunpack.c.l.b16 %v330
        %v398 = vunpack.c.h.b16 %v330
        %v399 = vunpack.c.l.b16 %v331
        %v400 = vunpack.c.h.b16 %v331
        %v401 = vunpack.c.l.b16 %v332
        %v402 = vunpack.c.h.b16 %v332
        %v403 = vunpack.c.l.b16 %v333
        %v404 = vunpack.c.h.b16 %v333
        %v405 = vunpack.c.l.b16 %v334
        %v406 = vunpack.c.h.b16 %v334
        %v407 = vunpack.c.l.b16 %v335
        %v408 = vunpack.c.h.b16 %v335
        %v409 = vunpack.c.l.b16 %v336
        %v410 = vunpack.c.h.b16 %v336
        %v411 = vunpack.c.l.b16 %v337
        %v412 = vunpack.c.h.b16 %v337
        %v413 = vunpack.c.l.b16 %v338
        %v414 = vunpack.c.h.b16 %v338
        %v415 = vunpack.c.l.b16 %v339
        %v416 = vunpack.c.h.b16 %v339
        %v417 = vunpack.c.l.b16 %v340
        %v418 = vunpack.c.h.b16 %v340
        %v419 = vunpack.c.l.b16 %v341
        %v420 = vunpack.c.h.b16 %v341
        %v421 = vunpack.c.l.b16 %v342
        %v422 = vunpack.c.h.b16 %v342
        %v423 = vpack.c.b16 %v393, %v391
        %v424 = vpack.c.b16 %v394, %v392
        %v425 = vpack.c.b16 %v397, %v395
        %v426 = vpack.c.b16 %v398, %v396
        %v427 = vpack.c.b16 %v401, %v399
        %v428 = vpack.c.b16 %v402, %v400
        %v429 = vpack.c.b16 %v405, %v403
        %v430 = vpack.c.b16 %v406, %v404
        %v431 = vpack.c.b16 %v409, %v407
        %v432 = vpack.c.b16 %v410, %v408
        %v433 = vpack.c.b16 %v413, %v411
        %v434 = vpack.c.b16 %v414, %v412
        %v435 = vpack.c.b16 %v417, %v415
        %v436 = vpack.c.b16 %v418, %v416
        %v437 = vpack.c.b16 %v421, %v419
        %v438 = vpack.c.b16 %v422, %v420
        %v487 = vunpack.c.l.b16 %v343
        %v488 = vunpack.c.l.b16 %v344
        %v489 = vunpack.c.l.b16 %v345
        %v490 = vunpack.c.l.b16 %v346
        %v491 = vunpack.c.l.b16 %v347
        %v492 = vunpack.c.l.b16 %v348
        %v493 = vunpack.c.l.b16 %v349
        %v494 = vunpack.c.l.b16 %v350
        %v495 = vunpack.c.l.b16 %v351
        %v496 = vunpack.c.l.b16 %v352
        %v497 = vunpack.c.l.b16 %v353
        %v498 = vunpack.c.l.b16 %v354
        %v499 = vunpack.c.l.b16 %v355
        %v500 = vunpack.c.l.b16 %v356
        %v501 = vunpack.c.l.b16 %v357
        %v502 = vunpack.c.l.b16 %v358
        %v503 = vunpack.c.l.b16 %v359
        %v504 = vunpack.c.l.b16 %v360
        %v505 = vunpack.c.l.b16 %v361
        %v506 = vunpack.c.l.b16 %v362
        %v507 = vunpack.c.l.b16 %v363
        %v508 = vunpack.c.l.b16 %v364
        %v509 = vunpack.c.l.b16 %v365
        %v510 = vunpack.c.l.b16 %v366
        %v511 = vunpack.c.l.b16 %v367
        %v512 = vunpack.c.l.b16 %v368
        %v513 = vunpack.c.l.b16 %v369
        %v514 = vunpack.c.l.b16 %v370
        %v515 = vunpack.c.l.b16 %v371
        %v516 = vunpack.c.l.b16 %v372
        %v517 = vunpack.c.l.b16 %v373
        %v518 = vunpack.c.l.b16 %v374
        %v519 = vpack.c.b16 %v488, %v487
        %v520 = vpack.c.b16 %v490, %v489
        %v521 = vpack.c.b16 %v492, %v491
        %v522 = vpack.c.b16 %v494, %v493
        %v523 = vpack.c.b16 %v496, %v495
        %v524 = vpack.c.b16 %v498, %v497
        %v525 = vpack.c.b16 %v500, %v499
        %v526 = vpack.c.b16 %v502, %v501
        %v527 = vpack.c.b16 %v504, %v503
        %v528 = vpack.c.b16 %v506, %v505
        %v529 = vpack.c.b16 %v508, %v507
        %v530 = vpack.c.b16 %v510, %v509
        %v531 = vpack.c.b16 %v512, %v511
        %v532 = vpack.c.b16 %v514, %v513
        %v533 = vpack.c.b16 %v516, %v515
        %v534 = vpack.c.b16 %v518, %v517
        %551 = vmatprep.subr.bf16.mxu0 0
        %552 = vmatpush1.bf16.msra.mxu0 %v519
        %553 = vmatprep.subr.bf16.mxu0 0
        %554 = vmatpush1.bf16.msra.mxu0 %v520
        %555 = vmatprep.subr.bf16.mxu0 0
        %556 = vmatpush1.bf16.msra.mxu0 %v521
        %557 = vmatprep.subr.bf16.mxu0 0
        %558 = vmatpush1.bf16.msra.mxu0 %v522
        %559 = vmatprep.subr.bf16.mxu0 0
        %560 = vmatpush1.bf16.msra.mxu0 %v523
        %561 = vmatprep.subr.bf16.mxu0 0
        %562 = vmatpush1.bf16.msra.mxu0 %v524
        %563 = vmatprep.subr.bf16.mxu0 0
        %564 = vmatpush1.bf16.msra.mxu0 %v525
        %565 = vmatprep.subr.bf16.mxu0 0
        %566 = vmatpush1.bf16.msra.mxu0 %v526
        %567 = vmatprep.subr.bf16.mxu0 0
        %568 = vmatpush1.bf16.msra.mxu0 %v527
        %569 = vmatprep.subr.bf16.mxu0 0
        %570 = vmatpush1.bf16.msra.mxu0 %v528
        %571 = vmatprep.subr.bf16.mxu0 0
        %572 = vmatpush1.bf16.msra.mxu0 %v529
        %573 = vmatprep.subr.bf16.mxu0 0
        %574 = vmatpush1.bf16.msra.mxu0 %v530
        %575 = vmatprep.subr.bf16.mxu0 0
        %576 = vmatpush1.bf16.msra.mxu0 %v531
        %577 = vmatprep.subr.bf16.mxu0 0
        %578 = vmatpush1.bf16.msra.mxu0 %v532
        %579 = vmatprep.subr.bf16.mxu0 0
        %580 = vmatpush1.bf16.msra.mxu0 %v533
        %581 = vmatprep.subr.bf16.mxu0 0
        %582 = vmatpush1.bf16.msra.mxu0 %v534
        %583 = vmatprep.mubr.bf16.mxu0 %v424
        %584 = vmatmul.mubr.bf16.gmra.mrb[0].mxu0 %v423
        %v585 = vpop.f32.mrb[0].mxu0
        %v586 = vadd.f32 0.0, %v585
        %v587 = vpop.f32.mrb[0].mxu0
        %v588 = vpop.f32.mrb[0].mxu0
        %v589 = vadd.f32 0.0, %v588
        %v590 = vpop.f32.mrb[0].mxu0
        %591 = vmatprep.mubr.bf16.mxu0 %v426
        %592 = vmatmul.mubr.bf16.gmra.mrb[0].mxu0 %v425
        %v593 = vpop.f32.mrb[0].mxu0
        %v594 = vadd.f32 0.0, %v593
        %v595 = vpop.f32.mrb[0].mxu0
        %v596 = vpop.f32.mrb[0].mxu0
        %v597 = vadd.f32 0.0, %v596
        %v598 = vpop.f32.mrb[0].mxu0
        %599 = vmatprep.mubr.bf16.mxu0 %v428
        %600 = vmatmul.mubr.bf16.gmra.mrb[0].mxu0 %v427
        %v601 = vpop.f32.mrb[0].mxu0
        %v602 = vadd.f32 0.0, %v601
        %v603 = vpop.f32.mrb[0].mxu0
        %v604 = vpop.f32.mrb[0].mxu0
        %v605 = vadd.f32 0.0, %v604
        %v606 = vpop.f32.mrb[0].mxu0
        %607 = vmatprep.mubr.bf16.mxu0 %v430
        %608 = vmatmul.mubr.bf16.gmra.mrb[0].mxu0 %v429
        %v609 = vpop.f32.mrb[0].mxu0
        %v610 = vadd.f32 0.0, %v609
        %v611 = vpop.f32.mrb[0].mxu0
        %v612 = vpop.f32.mrb[0].mxu0
        %v613 = vadd.f32 0.0, %v612
        %v614 = vpop.f32.mrb[0].mxu0
        %615 = vmatprep.mubr.bf16.mxu0 %v432
        %616 = vmatmul.mubr.bf16.gmra.mrb[0].mxu0 %v431
        %v617 = vpop.f32.mrb[0].mxu0
        %v618 = vadd.f32 0.0, %v617
        %v619 = vpop.f32.mrb[0].mxu0
        %v620 = vpop.f32.mrb[0].mxu0
        %v621 = vadd.f32 0.0, %v620
        %v622 = vpop.f32.mrb[0].mxu0
        %623 = vmatprep.mubr.bf16.mxu0 %v434
        %624 = vmatmul.mubr.bf16.gmra.mrb[0].mxu0 %v433
        %v625 = vpop.f32.mrb[0].mxu0
        %v626 = vadd.f32 0.0, %v625
        %v627 = vpop.f32.mrb[0].mxu0
        %v628 = vpop.f32.mrb[0].mxu0
        %v629 = vadd.f32 0.0, %v628
        %v630 = vpop.f32.mrb[0].mxu0
        %631 = vmatprep.mubr.bf16.mxu0 %v436
        %632 = vmatmul.mubr.bf16.gmra.mrb[0].mxu0 %v435
        %v633 = vpop.f32.mrb[0].mxu0
        %v634 = vadd.f32 0.0, %v633
        %v635 = vpop.f32.mrb[0].mxu0
        %v636 = vpop.f32.mrb[0].mxu0
        %v637 = vadd.f32 0.0, %v636
        %v638 = vpop.f32.mrb[0].mxu0
        %639 = vmatprep.mubr.bf16.mxu0 %v438
        %640 = vmatmul.mubr.bf16.gmra.mrb[0].mxu0 %v437
        %v641 = vpop.f32.mrb[0].mxu0
        %v642 = vadd.f32 0.0, %v641
        %v643 = vpop.f32.mrb[0].mxu0
        %v644 = vpop.f32.mrb[0].mxu0
        %v645 = vadd.f32 0.0, %v644
        %v646 = vpop.f32.mrb[0].mxu0
        %647 = vdwg.mxu0
        %v648 = vld [vmem:[#allocation2] sm:$0xff]
        %v649 = vld [vmem:[#allocation2 + $0x8] sm:$0xff]
        %v650 = vld [vmem:[%s288] sm:$0xff]
        %v651 = vld [vmem:[%s288 + $0x8] sm:$0xff]
        %652 = vmatprep.subr.mxu0 0.0
        %653 = vmatpush1.msra.mxu0 %v586
        %654 = vmatprep.subr.mxu0 0.0
        %655 = vmatpush1.msra.mxu0 %v589
        %656 = vmatprep.subr.mxu0 0.0
        %657 = vmatpush1.msra.mxu0 %v594
        %658 = vmatprep.subr.mxu0 0.0
        %659 = vmatpush1.msra.mxu0 %v597
        %660 = vmatprep.subr.mxu0 0.0
        %661 = vmatpush1.msra.mxu0 %v602
        %662 = vmatprep.subr.mxu0 0.0
        %663 = vmatpush1.msra.mxu0 %v605
        %664 = vmatprep.subr.mxu0 0.0
        %665 = vmatpush1.msra.mxu0 %v610
        %666 = vmatprep.subr.mxu0 0.0
        %667 = vmatpush1.msra.mxu0 %v613
        %668 = vmatprep.subr.mxu0 0.0
        %669 = vmatpush1.msra.mxu0 %v618
        %670 = vmatprep.subr.mxu0 0.0
        %671 = vmatpush1.msra.mxu0 %v621
        %672 = vmatprep.subr.mxu0 0.0
        %673 = vmatpush1.msra.mxu0 %v626
        %674 = vmatprep.subr.mxu0 0.0
        %675 = vmatpush1.msra.mxu0 %v629
        %676 = vmatprep.subr.mxu0 0.0
        %677 = vmatpush1.msra.mxu0 %v634
        %678 = vmatprep.subr.mxu0 0.0
        %679 = vmatpush1.msra.mxu0 %v637
        %680 = vmatprep.subr.mxu0 0.0
        %681 = vmatpush1.msra.mxu0 %v642
        %682 = vmatprep.subr.mxu0 0.0
        %683 = vmatpush1.msra.mxu0 %v645
        %684 = vmatprep.subr.mxu0 0.0
        %685 = vmatpush1.msra.mxu0 0.0
        %686 = vmatprep.subr.mxu0 0.0
        %687 = vmatpush1.msra.mxu0 0.0
        %688 = vmatprep.subr.mxu0 0.0
        %689 = vmatpush1.msra.mxu0 0.0
        %690 = vmatprep.subr.mxu0 0.0
        %691 = vmatpush1.msra.mxu0 0.0
        %692 = vmatprep.subr.mxu0 0.0
        %693 = vmatpush1.msra.mxu0 0.0
        %694 = vmatprep.subr.mxu0 0.0
        %695 = vmatpush1.msra.mxu0 0.0
        %696 = vmatprep.subr.mxu0 0.0
        %697 = vmatpush1.msra.mxu0 0.0
        %698 = vmatprep.subr.mxu0 0.0
        %699 = vmatpush1.msra.mxu0 0.0
        %700 = vmatprep.subr.mxu0 0.0
        %701 = vmatpush1.msra.mxu0 0.0
        %702 = vmatprep.subr.mxu0 0.0
        %703 = vmatpush1.msra.mxu0 0.0
        %704 = vmatprep.subr.mxu0 0.0
        %705 = vmatpush1.msra.mxu0 0.0
        %706 = vmatprep.subr.mxu0 0.0
        %707 = vmatpush1.msra.mxu0 0.0
        %708 = vmatprep.subr.mxu0 0.0
        %709 = vmatpush1.msra.mxu0 0.0
        %710 = vmatprep.subr.mxu0 0.0
        %711 = vmatpush1.msra.mxu0 0.0
        %712 = vmatprep.subr.mxu0 0.0
        %713 = vmatpush1.msra.mxu0 0.0
        %714 = vmatprep.subr.mxu0 0.0
        %715 = vmatpush1.msra.mxu0 0.0
        %716 = vmatprep.mubr.f32.mxu0 0.0
        %717 = vmatmul.mubr.f32.gmra.mrb[0].mxu0 %v650
        %v718 = vpop.f32.mrb[0].mxu0
        %v719 = vadd.f32 0.0, %v718
        %v720 = vpop.f32.mrb[0].mxu0
        %721 = vmatprep.mubr.f32.mxu0 0.0
        %722 = vmatmul.mubr.f32.gmra.mrb[0].mxu0 %v651
        %v723 = vpop.f32.mrb[0].mxu0
        %v724 = vadd.f32 0.0, %v723
        %v725 = vpop.f32.mrb[0].mxu0
        %726 = vdwg.mxu0
        %v727 = vadd.f32 %v648, %v719
        %v728 = vadd.f32 %v649, %v724
        %vm729 = vcmask 408576
        %730 = vst.msk [vmem:[#allocation2] sm:$0xff] %vm729, %v727
        %731 = vst.msk [vmem:[#allocation2 + $0x8] sm:$0xff] %vm729, %v728
        %p732 = scmp.eq.s32.totalorder %s27, 1
        // Predicated region
        $region87: #{tpu_custom_call.1} parent=73 // pred_check
          %p733 = pneg %p732
        $region88: #{tpu_custom_call.1} parent=73 // pred_check_branch
          %735 = sbr.rel (%p733) target = $region90
        $region89: #{tpu_custom_call.1} parent=73 // pred_region
          %v736 = vld [vmem:[#allocation2] sm:$0xff]
          %v737 = vld [vmem:[#allocation2 + $0x8] sm:$0xff]
          %v738 = vld [vmem:[%s3] sm:$0xff]
          %v739 = vld [vmem:[%s3 + $0x8] sm:$0xff]
          %v740 = vadd.f32 %v736, %v738
          %v741 = vadd.f32 %v737, %v739
          %v742 = vmax.f32 %v740, 0.0
          %v743 = vmax.f32 %v741, 0.0
          %v744 = vld [vmem:[%s4] sm:$0xff]
          %v745 = vld [vmem:[%s4 + $0x8] sm:$0xff]
          %v746 = vld [vmem:[%s4 + $0x10] sm:$0xff]
          %v747 = vld [vmem:[%s4 + $0x18] sm:$0xff]
          %v748 = vld [vmem:[%s4 + $0x20] sm:$0xff]
          %v749 = vld [vmem:[%s4 + $0x28] sm:$0xff]
          %v750 = vld [vmem:[%s4 + $0x30] sm:$0xff]
          %v751 = vld [vmem:[%s4 + $0x38] sm:$0xff]
          %v752 = vld [vmem:[%s4 + $0x40] sm:$0xff]
          %v753 = vld [vmem:[%s4 + $0x48] sm:$0xff]
          %v754 = vld [vmem:[%s4 + $0x50] sm:$0xff]
          %v755 = vld [vmem:[%s4 + $0x58] sm:$0xff]
          %v756 = vld [vmem:[%s4 + $0x60] sm:$0x3]
          %v757 = vld [vmem:[%s4 + $0x68] sm:$0x3]
          %v759 = vsel %vm729, %v742, 0
          %v762 = vsel %vm729, %v743, 0
          %vm764 = vcmask 1041408
          %v766 = vsel %vm764, %v756, 0
          %v769 = vsel %vm764, %v757, 0
          %771 = vmatprep.subr.mxu0 %v745
          %772 = vmatpush1.msra.mxu0 %v744
          %773 = vmatprep.subr.mxu0 %v747
          %774 = vmatpush1.msra.mxu0 %v746
          %775 = vmatprep.subr.mxu0 %v749
          %776 = vmatpush1.msra.mxu0 %v748
          %777 = vmatprep.subr.mxu0 %v751
          %778 = vmatpush1.msra.mxu0 %v750
          %779 = vmatprep.subr.mxu0 %v753
          %780 = vmatpush1.msra.mxu0 %v752
          %781 = vmatprep.subr.mxu0 %v755
          %782 = vmatpush1.msra.mxu0 %v754
          %783 = vmatprep.subr.mxu0 %v769
          %784 = vmatpush1.msra.mxu0 %v766
          %785 = vmatprep.subr.mxu0 0.0
          %786 = vmatpush1.msra.mxu0 0.0
          %787 = vmatprep.subr.mxu0 0.0
          %788 = vmatpush1.msra.mxu0 0.0
          %789 = vmatprep.subr.mxu0 0.0
          %790 = vmatpush1.msra.mxu0 0.0
          %791 = vmatprep.subr.mxu0 0.0
          %792 = vmatpush1.msra.mxu0 0.0
          %793 = vmatprep.subr.mxu0 0.0
          %794 = vmatpush1.msra.mxu0 0.0
          %795 = vmatprep.subr.mxu0 0.0
          %796 = vmatpush1.msra.mxu0 0.0
          %797 = vmatprep.subr.mxu0 0.0
          %798 = vmatpush1.msra.mxu0 0.0
          %799 = vmatprep.subr.mxu0 0.0
          %800 = vmatpush1.msra.mxu0 0.0
          %801 = vmatprep.subr.mxu0 0.0
          %802 = vmatpush1.msra.mxu0 0.0
          %803 = vmatprep.subr.mxu0 0.0
          %804 = vmatpush1.msra.mxu0 0.0
          %805 = vmatprep.subr.mxu0 0.0
          %806 = vmatpush1.msra.mxu0 0.0
          %807 = vmatprep.subr.mxu0 0.0
          %808 = vmatpush1.msra.mxu0 0.0
          %809 = vmatprep.subr.mxu0 0.0
          %810 = vmatpush1.msra.mxu0 0.0
          %811 = vmatprep.subr.mxu0 0.0
          %812 = vmatpush1.msra.mxu0 0.0
          %813 = vmatprep.subr.mxu0 0.0
          %814 = vmatpush1.msra.mxu0 0.0
          %815 = vmatprep.subr.mxu0 0.0
          %816 = vmatpush1.msra.mxu0 0.0
          %817 = vmatprep.subr.mxu0 0.0
          %818 = vmatpush1.msra.mxu0 0.0
          %819 = vmatprep.subr.mxu0 0.0
          %820 = vmatpush1.msra.mxu0 0.0
          %821 = vmatprep.subr.mxu0 0.0
          %822 = vmatpush1.msra.mxu0 0.0
          %823 = vmatprep.subr.mxu0 0.0
          %824 = vmatpush1.msra.mxu0 0.0
          %825 = vmatprep.subr.mxu0 0.0
          %826 = vmatpush1.msra.mxu0 0.0
          %827 = vmatprep.subr.mxu0 0.0
          %828 = vmatpush1.msra.mxu0 0.0
          %829 = vmatprep.subr.mxu0 0.0
          %830 = vmatpush1.msra.mxu0 0.0
          %831 = vmatprep.subr.mxu0 0.0
          %832 = vmatpush1.msra.mxu0 0.0
          %833 = vmatprep.subr.mxu0 0.0
          %834 = vmatpush1.msra.mxu0 0.0
          %835 = vmatprep.mubr.f32.mxu0 0.0
          %836 = vmatmul.mubr.f32.gmra.mrb[0].mxu0 %v759
          %v837 = vpop.f32.mrb[0].mxu0
          %v838 = vadd.f32 0.0, %v837
          %v839 = vpop.f32.mrb[0].mxu0
          %v840 = vadd.f32 0.0, %v839
          %841 = vmatprep.mubr.f32.mxu0 0.0
          %842 = vmatmul.mubr.f32.gmra.mrb[0].mxu0 %v762
          %v843 = vpop.f32.mrb[0].mxu0
          %v844 = vadd.f32 0.0, %v843
          %v845 = vpop.f32.mrb[0].mxu0
          %v846 = vadd.f32 0.0, %v845
          %847 = vdwg.mxu0
          %848 = vst [vmem:[%s317] sm:$0xff] %v838
          %849 = vst [vmem:[%s317 + $0x8] sm:$0xff] %v840
          %850 = vst [vmem:[%s317 + $0x10] sm:$0xff] %v844
          %851 = vst [vmem:[%s317 + $0x18] sm:$0xff] %v846
        $region90: #{tpu_custom_call.1} parent=73 // pred_fallthru
          _
        %s852 = sand.u32 %s159, 1
        %s853 = scalar_lea.sflag [#allocation5], %s852
        %s854 = sand.u32 %s159, 1
        %s855 = smul.addr %s854, 32
        %s856 = scalar_lea.vmem [#allocation7], %s855
        // Predicated region
        $region91: #{tpu_custom_call.1} parent=73 // pred_check
          %p857 = pneg %p169
        $region92: #{tpu_custom_call.1} parent=73 // pred_check_branch
          %859 = sbr.rel (%p857) target = $region94
        $region93: #{tpu_custom_call.1} parent=73 // pred_region
          %s861 = ssub.s32 512, 512
          %862 = vsyncadd %s853, %s861
          %s863 = smul.addr %s26, 4
          %s864 = smul.addr %s863, 128
          %s865 = scalar_lea.hbm %s5, %s864
          %s866 = sshll.u32 %s856, 4
          %s867 = int_to_ptr.vmem [resolvable:$true] %s866
          %872 = dma.vmem_to_hbm [thread:$0]  %s867, 512, %s865, %s853, 256, 256, 16
        $region94: #{tpu_custom_call.1} parent=73 // pred_fallthru
          _
      $region74: #{tpu_custom_call.1} parent=5 // pred_fallthru
        _
      %p873 = scmp.le.s32.totalorder 2, %s17
      // Predicated region
      $region95: #{tpu_custom_call.1} parent=5 // pred_check
        %p874 = pneg %p873
      $region96: #{tpu_custom_call.1} parent=5 // pred_check_branch
        %876 = sbr.rel (%p874) target = $region98
      $region97: #{tpu_custom_call.1} parent=5 // pred_region
        %s877 = ssub.s32 %s17, 2
        // Predicated region
        $region99: #{tpu_custom_call.1} parent=97 // pred_check
          %p878 = pneg %p175
        $region100: #{tpu_custom_call.1} parent=97 // pred_check_branch
          %880 = sbr.rel (%p878) target = $region102
        $region101: #{tpu_custom_call.1} parent=97 // pred_region
          %s881 = sand.u32 %s160, 1
          %s882 = scalar_lea.sflag [#allocation5], %s881
          %s883 = sand.u32 %s160, 1
          %s884 = smul.addr %s883, 32
          %s885 = scalar_lea.vmem [#allocation7], %s884
          %886 = dma.done %s882, 512
        $region102: #{tpu_custom_call.1} parent=97 // pred_fallthru
          _
      $region98: #{tpu_custom_call.1} parent=5 // pred_fallthru
        _
    $region6: #{tpu_custom_call.1} parent=1 // loop_footer
      %s21 = sadd.s32 1, %s17
    $region7: #{tpu_custom_call.1} parent=1 // loop_footer_branch
      %16 = sbr.rel target = $region3
    $region8: #{tpu_custom_call.1} parent=1 // loop_exit
      _
    %887 = vsyncpa [#allocation4], 1
    %s888 = scalar_lea.sflag [#allocation4], 1
    %889 = vsyncpa %s888, 1
    %890 = vsyncpa [#allocation5], 1
    %s891 = scalar_lea.sflag [#allocation5], 1
    %892 = vsyncpa %s891, 1

</llo_original>
